<compile_context>
chip_gen: v7x
topology: tpu7x:2x2x1
jax: 0.10.0
libtpu: 0.0.40
codegen_flags: <defaults>
</compile_context>

<pallas_src>
import math

import jax
import jax.numpy as jnp
from jax.experimental import pallas as pl
from jax.experimental.pallas import tpu as pltpu


def _round_up(x: int, m: int) -> int:
    return ((x + m - 1) // m) * m


def shared_linear_kernel(x_ref, w_ref, b_ref, o_ref):
    # x_ref: (TB, in_features)
    # w_ref: (1, in_features)        -- shared weight row (VMEM-resident)
    # b_ref: (1, out_pad)            -- bias, lane-dense padded (VMEM-resident)
    # o_ref: (TB, out_pad)
    # Accumulate in f32 explicitly (matters on v5e where the VPU has no bf16).
    x = x_ref[...].astype(jnp.float32)
    w = w_ref[...].astype(jnp.float32)
    s = jnp.sum(x * w, axis=-1, keepdims=True)          # (TB, 1) per-row dot
    o_ref[...] = (s + b_ref[...].astype(jnp.float32)).astype(o_ref.dtype)


def shared_linear(x, weight, bias=None, out_features=None, *, block_b=512):
    """x: (B, in_features); weight: (1, in_features); bias: (out_features,) or None."""
    B, in_features = x.shape
    if bias is not None:
        out_features = bias.shape[0]
    assert out_features is not None, "out_features required when bias is None"

    # Lane-dense output: pad out_features up to a multiple of 128 (avoids
    # masked vst partial stores); slice back afterwards.
    out_pad = max(128, _round_up(out_features, 128))
    b_full = jnp.zeros((1, out_pad), dtype=x.dtype)
    if bias is not None:
        b_full = b_full.at[0, :out_features].set(bias.astype(x.dtype))

    # Batch tiling: TB multiple of 8 (f32 sublane), large enough to pipeline.
    tb = min(block_b, _round_up(B, 8))
    b_pad = _round_up(B, tb)
    if b_pad != B:
        x_in = jnp.zeros((b_pad, in_features), dtype=x.dtype).at[:B, :].set(x)
    else:
        x_in = x

    # NOTE: in_features is kept as a single full-width block; for very large
    # in_features a K-tiling grid axis with a scratch accumulator would keep
    # the x tile within VMEM (not needed at these sizes).
    out_padded = pl.pallas_call(
        shared_linear_kernel,
        out_shape=jax.ShapeDtypeStruct((b_pad, out_pad), x.dtype),
        grid=(b_pad // tb,),
        in_specs=[
            pl.BlockSpec((tb, in_features), lambda i: (i, 0)),
            pl.BlockSpec((1, in_features), lambda i: (0, 0)),
            pl.BlockSpec((1, out_pad), lambda i: (0, 0)),
        ],
        out_specs=pl.BlockSpec((tb, out_pad), lambda i: (i, 0)),
        compiler_params=pltpu.CompilerParams(
            dimension_semantics=("parallel",)
        ),
    )(x_in, weight, b_full)

    return out_padded[:B, :out_features]


def init_params(key, in_features, out_features, dtype=jnp.float32):
    """Deterministic kaiming_uniform_(a=sqrt(5)) init matching reset_parameters()."""
    kw, kb = jax.random.split(key)
    fan_in = in_features
    gain = math.sqrt(2.0 / (1.0 + 5.0))           # a = sqrt(5)
    w_bound = gain * math.sqrt(3.0 / fan_in)      # kaiming_uniform bound
    weight = jax.random.uniform(
        kw, (1, in_features), dtype=dtype, minval=-w_bound, maxval=w_bound
    )
    b_bound = 1.0 / math.sqrt(fan_in)
    bias = jax.random.uniform(
        kb, (out_features,), dtype=dtype, minval=-b_bound, maxval=b_bound
    )
    return weight, bias


if __name__ == "__main__":
    key = jax.random.PRNGKey(0)
    k_x, k_p = jax.random.split(key)

    B, in_features, out_features = 8, 32, 16
    x = jax.random.normal(k_x, (B, in_features), dtype=jnp.float32)
    weight, bias = init_params(k_p, in_features, out_features)

    out = shared_linear(x, weight, bias)
    out = jax.block_until_ready(out)

    # Reference: F.linear(x, weight.expand(out, -1), bias)
    ref = x @ jnp.broadcast_to(weight, (out_features, in_features)).T + bias
    assert out.shape == (B, out_features)
    assert jnp.allclose(out, ref, atol=1e-5, rtol=1e-5)

    # Also exercise the bias-free path (PyTorch module allows bias=False).
    out_nb = jax.block_until_ready(
        shared_linear(x, weight, None, out_features=out_features)
    )
    ref_nb = x @ jnp.broadcast_to(weight, (out_features, in_features)).T
    assert jnp.allclose(out_nb, ref_nb, atol=1e-5, rtol=1e-5)

    print("KERNEL_OK")
</pallas_src>

<mosaic_0001>
module attributes {stable_mosaic.version = 11 : i64} {
  func.func @shared_linear_kernel(%arg0: i32, %arg1: memref<8x32xf32, #tpu.memory_space<vmem>>, %arg2: memref<1x32xf32, #tpu.memory_space<vmem>>, %arg3: memref<1x128xf32, #tpu.memory_space<vmem>>, %arg4: memref<8x128xf32, #tpu.memory_space<vmem>>) attributes {dimension_semantics = [#tpu.dimension_semantics<parallel>], iteration_bounds = array<i64: 1>, scalar_prefetch = 0 : i64, scratch_operands = 0 : i64, tpu.core_type = #tpu.core_type<tc>, window_params = [{transform_indices = @transform_0, window_bounds = array<i64: 8, 32>}, {pipeline_mode = #tpu.pipeline_mode<synchronous>, transform_indices = @transform_1, window_bounds = array<i64: 1, 32>}, {pipeline_mode = #tpu.pipeline_mode<synchronous>, transform_indices = @transform_2, window_bounds = array<i64: 1, 128>}, {transform_indices = @transform_3, window_bounds = array<i64: 8, 128>}]} {
    %c0 = arith.constant 0 : index
    %c0_0 = arith.constant 0 : index
    %0 = vector.load %arg1[%c0, %c0_0] : memref<8x32xf32, #tpu.memory_space<vmem>>, vector<8x32xf32>
    %c0_1 = arith.constant 0 : index
    %c0_2 = arith.constant 0 : index
    %1 = vector.load %arg2[%c0_1, %c0_2] : memref<1x32xf32, #tpu.memory_space<vmem>>, vector<1x32xf32>
    %2 = vector.broadcast %1 : vector<1x32xf32> to vector<8x32xf32>
    %3 = arith.mulf %0, %2 : vector<8x32xf32>
    %cst = arith.constant dense<0.000000e+00> : vector<8xf32>
    %4 = vector.multi_reduction <add>, %3, %cst [1] : vector<8x32xf32> to vector<8xf32>
    %5 = vector.shape_cast %4 : vector<8xf32> to vector<8x1xf32>
    %c0_3 = arith.constant 0 : index
    %c0_4 = arith.constant 0 : index
    %6 = vector.load %arg3[%c0_3, %c0_4] : memref<1x128xf32, #tpu.memory_space<vmem>>, vector<1x128xf32>
    %7 = vector.broadcast %5 : vector<8x1xf32> to vector<8x128xf32>
    %8 = vector.broadcast %6 : vector<1x128xf32> to vector<8x128xf32>
    %9 = arith.addf %7, %8 : vector<8x128xf32>
    %c0_5 = arith.constant 0 : index
    %c0_6 = arith.constant 0 : index
    %10 = vector.load %arg4[%c0_5, %c0_6] : memref<8x128xf32, #tpu.memory_space<vmem>>, vector<8x128xf32>
    tpu.vector_store %arg4[%c0_5, %c0_6], %9 {strides = array<i32>} : memref<8x128xf32, #tpu.memory_space<vmem>>, vector<8x128xf32>,
    return
  }
  func.func @transform_0(%arg0: i32) -> (i32, i32) {
    %c0_i32 = arith.constant 0 : i32
    %c0_i32_0 = arith.constant 0 : i32
    return %arg0, %c0_i32 : i32, i32
  }
  func.func @transform_1(%arg0: i32) -> (i32, i32) {
    %c0_i32 = arith.constant 0 : i32
    %c0_i32_0 = arith.constant 0 : i32
    %c0_i32_1 = arith.constant 0 : i32
    return %c0_i32, %c0_i32_0 : i32, i32
  }
  func.func @transform_2(%arg0: i32) -> (i32, i32) {
    %c0_i32 = arith.constant 0 : i32
    %c0_i32_0 = arith.constant 0 : i32
    %c0_i32_1 = arith.constant 0 : i32
    return %c0_i32, %c0_i32_0 : i32, i32
  }
  func.func @transform_3(%arg0: i32) -> (i32, i32) {
    %c0_i32 = arith.constant 0 : i32
    %c0_i32_0 = arith.constant 0 : i32
    return %arg0, %c0_i32 : i32, i32
  }
}

</mosaic_0001>

<llo_original>
// kernel: tpu_custom_call.1
$region0: #{tpu_custom_call.1}
  #allocation0 [shape = 'u32[]', space=smem, size = 0x4, offset = 0x4, fixed_abs, tag = 'smem constant byte address 0x4 - core index']
  #allocation1 [shape = 'u32[144,128]{1,0:T(1,128)}', space=vmem, size = 0x12000, scoped, tag = 'internal scratch']
  %s0 = inlined_call_operand.hbm [shape: f32[8,32], index: 0, kind: input, shape index: {}]
  %s1 = inlined_call_operand.vmem [shape: f32[1,32], index: 1, kind: input, shape index: {}]
  %s2 = inlined_call_operand.vmem [shape: f32[1,128], index: 2, kind: input, shape index: {}]
  %s3 = inlined_call_operand.hbm [shape: f32[8,128], index: 3, kind: output, shape index: {}]
  %s4 = sld [smem:[#allocation0]]
  $region26: #{tpu_custom_call.1} parent=0
    _
  %s6 = ssub.s32 1, %s4
  %s7 = scalar_select 0, %s6, %s4
  $region1: #{tpu_custom_call.1} parent=0
    #allocation2 [shape = 'u8[4096]{0}', space=vmem, size = 0x1000, scoped, tag = 'input window, operand 0, single buffered']
    #allocation3 [shape = 's32[1]{0}', space=sflag, size = 0x4, scoped, tag = 'scoped memory for tpu_custom_call.1']
    #allocation4 [shape = 's32[1]{0}', space=sflag, size = 0x4, scoped, tag = 'scoped memory for tpu_custom_call.1']
    #allocation5 [shape = 'u8[4096]{0}', space=vmem, size = 0x1000, scoped, tag = 'output window, operand 0, single buffered']
    %8 = vsyncpa [#allocation3], 0
    %9 = vsyncpa [#allocation4], 0
    // Predicated region
    $region2: #{tpu_custom_call.1} parent=1 // pred_check
      _
    $region3: #{tpu_custom_call.1} parent=1 // pred_check_branch
      %11 = sbr.rel (0) target = $region5
    $region4: #{tpu_custom_call.1} parent=1 // pred_region
      %s13 = ssub.s32 128, 128
      %14 = vsyncadd [#allocation3], %s13
      %s16 = sshll.u32 [#allocation2], 4
      %s17 = int_to_ptr.vmem [resolvable:$true] %s16
      %19 = dma.hbm_to_vmem [thread:$0]  %s0, 128, %s17, [#allocation3]
    $region5: #{tpu_custom_call.1} parent=1 // pred_fallthru
      _
    // Predicated region
    $region6: #{tpu_custom_call.1} parent=1 // pred_check
      _
    $region7: #{tpu_custom_call.1} parent=1 // pred_check_branch
      %21 = sbr.rel (0) target = $region9
    $region8: #{tpu_custom_call.1} parent=1 // pred_region
      _
    $region9: #{tpu_custom_call.1} parent=1 // pred_fallthru
      _
    // Predicated region
    $region10: #{tpu_custom_call.1} parent=1 // pred_check
      _
    $region11: #{tpu_custom_call.1} parent=1 // pred_check_branch
      %23 = sbr.rel (0) target = $region13
    $region12: #{tpu_custom_call.1} parent=1 // pred_region
      _
    $region13: #{tpu_custom_call.1} parent=1 // pred_fallthru
      _
    // Predicated region
    $region14: #{tpu_custom_call.1} parent=1 // pred_check
      _
    $region15: #{tpu_custom_call.1} parent=1 // pred_check_branch
      %25 = sbr.rel (0) target = $region17
    $region16: #{tpu_custom_call.1} parent=1 // pred_region
      %26 = dma.done [#allocation3], 128
    $region17: #{tpu_custom_call.1} parent=1 // pred_fallthru
      _
    %v27 = vld [vmem:[#allocation2] sm:$0xff]
    %v28 = vld [vmem:[%s1] sm:$0x1]
    %v30 = vlaneseq
    %v31 = vshrl.u32 %v30, 7
    %v32 = vsub.s32 0, %v31
    %v33 = vrot.slane %v28, %v32
    %v35 = vmul.f32 %v27, %v33
    %vm36 = vcmask 261120
    %v37 = vsel %vm36, %v35, 0.0
    %38 = vadd.xlane.f32.xlu0 %v37
    %v39 = vpop.xlane.xlu0 %38
    %v40 = vld [vmem:[%s2] sm:$0x1]
    %v42 = vlaneseq
    %v43 = vshrl.u32 %v42, 7
    %v44 = vsub.s32 0, %v43
    %v45 = vrot.slane %v40, %v44
    %v47 = vadd.f32 %v39, %v45
    %48 = vst [vmem:[#allocation5] sm:$0xff] %v47
    // Predicated region
    $region18: #{tpu_custom_call.1} parent=1 // pred_check
      _
    $region19: #{tpu_custom_call.1} parent=1 // pred_check_branch
      %50 = sbr.rel (0) target = $region21
    $region20: #{tpu_custom_call.1} parent=1 // pred_region
      %s52 = ssub.s32 128, 128
      %53 = vsyncadd [#allocation4], %s52
      %s55 = sshll.u32 [#allocation5], 4
      %s56 = int_to_ptr.vmem [resolvable:$true] %s55
      %58 = dma.vmem_to_hbm [thread:$0]  %s56, 128, %s3, [#allocation4]
    $region21: #{tpu_custom_call.1} parent=1 // pred_fallthru
      _
    // Predicated region
    $region22: #{tpu_custom_call.1} parent=1 // pred_check
      _
    $region23: #{tpu_custom_call.1} parent=1 // pred_check_branch
      %60 = sbr.rel (0) target = $region25
    $region24: #{tpu_custom_call.1} parent=1 // pred_region
      %61 = dma.done [#allocation4], 128
    $region25: #{tpu_custom_call.1} parent=1 // pred_fallthru
      _
    %62 = vsyncpa [#allocation3], 1
    %63 = vsyncpa [#allocation4], 1

</llo_original>
